<compile_context>
chip_gen: v7x
topology: tpu7x:2x2x1
jax: 0.10.0
libtpu: 0.0.40
codegen_flags: <defaults>
</compile_context>

<pallas_src>
import math
from functools import partial

import jax
import jax.numpy as jnp
import numpy as np
from jax.experimental import pallas as pl
from jax.experimental.pallas import tpu as pltpu

K = 4  # kernel_size == stride of both ConvTranspose1d layers (no output overlap)


def _round_up(a, m):
    return ((a + m - 1) // m) * m


# ---------------------------------------------------------------------------
# Pallas kernel: one MXU matmul + bias + sigmoid per row-tile.
# ---------------------------------------------------------------------------
def _final_output_kernel(x_ref, w_ref, b_ref, o_ref):
    # In-kernel f32 -> bf16 cast of x (free VPU filler in a mem-bound kernel;
    # avoids a separate XLA convert pass over x in HBM).
    x = x_ref[...].astype(w_ref.dtype)
    # bf16 x bf16 -> f32 accumulate on the MXU.
    z = jnp.dot(x, w_ref[...], preferred_element_type=jnp.float32)
    t = z + b_ref[...]
    # sigmoid(t) == 0.5*tanh(0.5*t) + 0.5 : single EUP op + cheap VALU ops.
    y = 0.5 * jnp.tanh(0.5 * t) + 0.5
    o_ref[...] = y.astype(o_ref.dtype)


# ---------------------------------------------------------------------------
# One-time parameter folding (do this at param-load time, not per call).
# ---------------------------------------------------------------------------
def _apply_block_diag(A, W2r, Co):
    """A @ block_diag(W2r x K) without materializing the zero-padded weight.

    A: (R, K*Co)  ->  (R, K*K*Co);  W2r: (Co, K*Co).
    Column ordering matches flat sequence position 4*k1 + k2, channel o.
    """
    R = A.shape[0]
    return jnp.einsum("rkc,cj->rkj", A.reshape(R, K, Co), W2r).reshape(R, K * K * Co)


def prepare_params(params, compute_dtype=jnp.bfloat16):
    """Fold Conv1d + 2x ConvTranspose1d into a single (Cin, ~16*Co) matmul.

    Note: weights are folded in f32 and then cast to `compute_dtype` (bf16 by
    default).  Pass compute_dtype=jnp.float32 for an accuracy-first path.
    Columns are zero-padded up to a multiple of 128 for lane-dense stores.
    """
    w0, b0, w1, b1, w2, b2 = params
    Co, Cin = w0.shape[0], w0.shape[1]
    KKCo = K * K * Co

    # Conv1d weight (Co, Cin, 1) -> (Cin, Co)
    W0 = jnp.transpose(w0[:, :, 0], (1, 0)).astype(jnp.float32)
    # ConvTranspose1d weight (Cin=Co, Cout=Co, K) -> (Co, K*Co), column = k*Co + o
    W1r = jnp.transpose(w1, (0, 2, 1)).reshape(Co, K * Co).astype(jnp.float32)
    W2r = jnp.transpose(w2, (0, 2, 1)).reshape(Co, K * Co).astype(jnp.float32)

    # Fold weights:  Wtot = W0 @ W1r @ block_diag(W2r)        -> (Cin, 16*Co)
    W01 = W0 @ W1r
    Wtot = _apply_block_diag(W01, W2r, Co)

    # Fold biases:   btot = (b0 @ W1r + tile(b1)) @ BD(W2r) + tile(b2)
    b01 = b0.astype(jnp.float32)[None, :] @ W1r + jnp.tile(b1, K)[None, :]
    btot = _apply_block_diag(b01, W2r, Co) + jnp.tile(b2, K * K)[None, :]

    # Pad columns to a multiple of 128 so output stores are never masked.
    KKCo_pad = _round_up(KKCo, 128)
    if KKCo_pad != KKCo:
        Wtot = jnp.pad(Wtot, ((0, 0), (0, KKCo_pad - KKCo)))
        btot = jnp.pad(btot, ((0, 0), (0, KKCo_pad - KKCo)))

    return Wtot.astype(compute_dtype), btot.astype(jnp.float32), Co


# ---------------------------------------------------------------------------
# Per-call wrapper: reshape + tiled pallas_call (one jitted program).
# ---------------------------------------------------------------------------
@partial(jax.jit, static_argnames=("co", "out_dtype"))
def final_output(x, Wtot, btot, *, co, out_dtype=jnp.float32):
    """x: (B, L, C_in) channels-last (PyTorch branch x.shape[1] != in_channel).

    Returns (B, h, h, C_out) with h = sqrt(16*L), dtype out_dtype.
    """
    B, L, Cin = x.shape
    assert Wtot.shape[0] == Cin, (Wtot.shape, Cin)
    KKCo_pad = Wtot.shape[1]
    KKCo = K * K * co
    out_bytes = jnp.dtype(out_dtype).itemsize

    N = B * L
    x2d = x.reshape(N, Cin)  # stays f32 in HBM; cast happens inside the kernel

    # ---- Row-tile selection (all static / trace-time) ----------------------
    # sublane multiple: 16 if any packed (sub-32-bit) block along rows, else 8.
    row_mult = 16 if out_bytes < 4 else 8

    # Big tiles approach the HBM roofline; cap at ceil(N/2) so the grid always
    # has >= 2 steps (v7x second TensorCore + pipelining).
    tile_n = min(4096, _round_up(N, row_mult))
    tile_n = min(tile_n, max(row_mult, _round_up(pl.cdiv(N, 2), row_mult)))

    # VMEM budget: double-buffered x + out blocks, plus the compiler-managed
    # f32 matmul intermediate.  x's last dim is lane-padded to 128 in VMEM.
    budget = 24 * 1024 * 1024

    def _vmem_bytes(t):
        x_blk = t * max(Cin, 128) * 4           # f32, lane-padded
        out_blk = t * KKCo_pad * out_bytes
        z_blk = t * KKCo_pad * 4                # f32 accumulate + epilogue temp
        return 2 * (x_blk + out_blk) + z_blk

    while tile_n > row_mult and _vmem_bytes(tile_n) > budget:
        tile_n = max(row_mult, _round_up(tile_n // 2, row_mult))

    grid = (pl.cdiv(N, tile_n),)

    # Memory-bound cost hint for XLA's scheduler.
    cost = pl.CostEstimate(
        flops=2 * N * Cin * KKCo_pad,
        transcendentals=N * KKCo_pad,
        bytes_accessed=N * (Cin * 4 + KKCo_pad * out_bytes)
        + Cin * KKCo_pad * Wtot.dtype.itemsize
        + KKCo_pad * 4,
    )

    out2d = pl.pallas_call(
        _final_output_kernel,
        out_shape=jax.ShapeDtypeStruct((N, KKCo_pad), out_dtype),
        grid=grid,
        in_specs=[
            pl.BlockSpec((tile_n, Cin), lambda i: (i, 0)),      # x: streamed row tiles
            pl.BlockSpec((Cin, KKCo_pad), lambda i: (0, 0)),    # Wtot: VMEM-resident
            pl.BlockSpec((1, KKCo_pad), lambda i: (0, 0)),      # btot: VMEM-resident
        ],
        out_specs=pl.BlockSpec((tile_n, KKCo_pad), lambda i: (i, 0)),
        compiler_params=pltpu.CompilerParams(
            dimension_semantics=("parallel",),                  # megacore on v7x
            vmem_limit_bytes=32 * 1024 * 1024,
        ),
        cost_estimate=cost,
    )(x2d, Wtot, btot)

    # Strip lane padding (no-op when 16*Co is already a multiple of 128).
    if KKCo_pad != KKCo:
        out2d = out2d[:, :KKCo]

    # (N, 16*Co): row n = b*L + l, column = 16-position * Co + channel
    y = out2d.reshape(B, L * K * K, co)
    h = int(math.isqrt(L * K * K))
    assert h * h == L * K * K, "16*L must be a perfect square for the final view"
    return y.reshape(B, h, h, co)


# ---------------------------------------------------------------------------
# Pure-JAX reference (mirrors the PyTorch forward exactly, f32) for validation.
# ---------------------------------------------------------------------------
def reference(x, params):
    w0, b0, w1, b1, w2, b2 = params
    B = x.shape[0]
    Co = w0.shape[0]
    # torch: x.shape[1] != in_channel -> transpose(2, 1)  => (B, Cin, L)
    xc = jnp.transpose(x, (0, 2, 1))
    # Conv1d k=1
    z = jnp.einsum("bcl,oc->bol", xc, w0[:, :, 0]) + b0[None, :, None]
    # ConvTranspose1d k=4 s=4:  y[b,o,4l+k] = sum_c z[b,c,l] * w[c,o,k] + bias[o]
    y = jnp.einsum("bcl,cok->bolk", z, w1)
    y = y.reshape(B, Co, -1) + b1[None, :, None]
    y = jnp.einsum("bcl,cok->bolk", y, w2)
    y = y.reshape(B, Co, -1) + b2[None, :, None]
    # torch: x.shape[1] == out_channel -> transpose(2, 1)  => (B, 16L, Co)
    y = jnp.transpose(y, (0, 2, 1))
    y = jax.nn.sigmoid(y)
    h = int(math.isqrt(y.shape[1]))
    return y.reshape(B, h, h, Co)


if __name__ == "__main__":
    # Small shapes: in_channel=8, out_channel=8, input (B=2, L=16, Cin=8).
    # 16*L = 256 is a perfect square -> final output (2, 16, 16, 8).
    # 16*Co = 128 -> lane-dense output stores (padding path is a no-op here).
    B, L, Cin, Co = 2, 16, 8, 8

    key = jax.random.PRNGKey(0)
    ks = jax.random.split(key, 7)
    w0 = 0.2 * jax.random.normal(ks[0], (Co, Cin, 1), jnp.float32)   # Conv1d weight
    b0 = 0.1 * jax.random.normal(ks[1], (Co,), jnp.float32)
    w1 = 0.2 * jax.random.normal(ks[2], (Co, Co, K), jnp.float32)    # ConvTranspose1d weight
    b1 = 0.1 * jax.random.normal(ks[3], (Co,), jnp.float32)
    w2 = 0.2 * jax.random.normal(ks[4], (Co, Co, K), jnp.float32)
    b2 = 0.1 * jax.random.normal(ks[5], (Co,), jnp.float32)
    params = (w0, b0, w1, b1, w2, b2)

    x = jax.random.normal(ks[6], (B, L, Cin), jnp.float32)

    # One-time weight folding (bf16 compute, f32 bias/accumulate).
    Wtot, btot, Co_f = prepare_params(params)
    jax.block_until_ready((Wtot, btot))

    ref = jax.block_until_ready(reference(x, params))

    # f32-output path (matches the original module's output dtype).
    out = jax.block_until_ready(final_output(x, Wtot, btot, co=Co_f))
    assert out.shape == (B, 16, 16, Co), out.shape
    assert out.dtype == jnp.float32
    # bf16 weights with f32 accumulation: loosen tolerance vs the f32 reference.
    np.testing.assert_allclose(np.asarray(out), np.asarray(ref), rtol=2e-2, atol=2e-2)

    # bf16-output path (halves the dominant HBM write stream; opt-in).
    out_bf16 = jax.block_until_ready(
        final_output(x, Wtot, btot, co=Co_f, out_dtype=jnp.bfloat16)
    )
    assert out_bf16.dtype == jnp.bfloat16
    np.testing.assert_allclose(
        np.asarray(out_bf16, dtype=np.float32), np.asarray(ref), rtol=3e-2, atol=3e-2
    )

    print("KERNEL_OK")
</pallas_src>

<mosaic_0001>
module attributes {stable_mosaic.version = 11 : i64} {
  func.func @_final_output_kernel(%arg0: i32, %arg1: memref<16x8xf32, #tpu.memory_space<vmem>>, %arg2: memref<8x128xbf16, #tpu.memory_space<vmem>>, %arg3: memref<1x128xf32, #tpu.memory_space<vmem>>, %arg4: memref<16x128xf32, #tpu.memory_space<vmem>>) attributes {dimension_semantics = [#tpu.dimension_semantics<parallel>], iteration_bounds = array<i64: 2>, scalar_prefetch = 0 : i64, scratch_operands = 0 : i64, tpu.core_type = #tpu.core_type<tc>, window_params = [{transform_indices = @transform_0, window_bounds = array<i64: 16, 8>}, {pipeline_mode = #tpu.pipeline_mode<synchronous>, transform_indices = @transform_1, window_bounds = array<i64: 8, 128>}, {pipeline_mode = #tpu.pipeline_mode<synchronous>, transform_indices = @transform_2, window_bounds = array<i64: 1, 128>}, {transform_indices = @transform_3, window_bounds = array<i64: 16, 128>}]} {
    %c0 = arith.constant 0 : index
    %c0_0 = arith.constant 0 : index
    %0 = vector.load %arg1[%c0, %c0_0] : memref<16x8xf32, #tpu.memory_space<vmem>>, vector<16x8xf32>
    %1 = arith.truncf %0 : vector<16x8xf32> to vector<16x8xbf16>
    %c0_1 = arith.constant 0 : index
    %c0_2 = arith.constant 0 : index
    %2 = vector.load %arg2[%c0_1, %c0_2] : memref<8x128xbf16, #tpu.memory_space<vmem>>, vector<8x128xbf16>
    %cst = arith.constant dense<0.000000e+00> : vector<16x128xf32>
    %3 = tpu.matmul %1, %2, %cst {dimension_numbers = #tpu.dot_dimension_numbers<[1], [0], [0], [1], [0, 0, 1, 1], [], []>} : vector<16x8xbf16>, vector<8x128xbf16>, vector<16x128xf32> -> vector<16x128xf32>
    %c0_3 = arith.constant 0 : index
    %c0_4 = arith.constant 0 : index
    %4 = vector.load %arg3[%c0_3, %c0_4] : memref<1x128xf32, #tpu.memory_space<vmem>>, vector<1x128xf32>
    %5 = vector.broadcast %4 : vector<1x128xf32> to vector<16x128xf32>
    %6 = arith.addf %3, %5 : vector<16x128xf32>
    %cst_5 = arith.constant 5.000000e-01 : f32
    %7 = vector.broadcast %cst_5 : f32 to vector<16x128xf32>
    %8 = arith.mulf %7, %6 : vector<16x128xf32>
    %9 = math.tanh %8 : vector<16x128xf32>
    %cst_6 = arith.constant 5.000000e-01 : f32
    %10 = vector.broadcast %cst_6 : f32 to vector<16x128xf32>
    %11 = arith.mulf %10, %9 : vector<16x128xf32>
    %cst_7 = arith.constant 5.000000e-01 : f32
    %12 = vector.broadcast %cst_7 : f32 to vector<16x128xf32>
    %13 = arith.addf %11, %12 : vector<16x128xf32>
    %c0_8 = arith.constant 0 : index
    %c0_9 = arith.constant 0 : index
    %14 = vector.load %arg4[%c0_8, %c0_9] : memref<16x128xf32, #tpu.memory_space<vmem>>, vector<16x128xf32>
    tpu.vector_store %arg4[%c0_8, %c0_9], %13 {strides = array<i32>} : memref<16x128xf32, #tpu.memory_space<vmem>>, vector<16x128xf32>,
    return
  }
  func.func @transform_0(%arg0: i32) -> (i32, i32) {
    %c0_i32 = arith.constant 0 : i32
    %c0_i32_0 = arith.constant 0 : i32
    return %arg0, %c0_i32 : i32, i32
  }
  func.func @transform_1(%arg0: i32) -> (i32, i32) {
    %c0_i32 = arith.constant 0 : i32
    %c0_i32_0 = arith.constant 0 : i32
    %c0_i32_1 = arith.constant 0 : i32
    return %c0_i32, %c0_i32_0 : i32, i32
  }
  func.func @transform_2(%arg0: i32) -> (i32, i32) {
    %c0_i32 = arith.constant 0 : i32
    %c0_i32_0 = arith.constant 0 : i32
    %c0_i32_1 = arith.constant 0 : i32
    return %c0_i32, %c0_i32_0 : i32, i32
  }
  func.func @transform_3(%arg0: i32) -> (i32, i32) {
    %c0_i32 = arith.constant 0 : i32
    %c0_i32_0 = arith.constant 0 : i32
    return %arg0, %c0_i32 : i32, i32
  }
}

</mosaic_0001>

<llo_original>
// kernel: final_output.1
$region0: #{final_output.1}
  #allocation0 [shape = 'u32[]', space=smem, size = 0x4, offset = 0x4, fixed_abs, tag = 'smem constant byte address 0x4 - core index']
  #allocation1 [shape = 'u32[144,128]{1,0:T(1,128)}', space=vmem, size = 0x12000, scoped, tag = 'internal scratch']
  %s0 = inlined_call_operand.vmem [shape: f32[32,8], index: 0, kind: input, shape index: {}]
  %s1 = inlined_call_operand.vmem [shape: bf16[8,128], index: 1, kind: input, shape index: {}]
  %s2 = inlined_call_operand.vmem [shape: f32[1,128], index: 2, kind: input, shape index: {}]
  %s3 = inlined_call_operand.vmem [shape: f32[32,128], index: 3, kind: output, shape index: {}]
  %s4 = sld [smem:[#allocation0]]
  $region45: #{final_output.1} parent=0
    _
  %s6 = ssub.s32 1, %s4
  %s7 = scalar_select 0, %s6, %s4
  loop: start=0, step=1, limit=4
  $region2: #{final_output.1} parent=0 // loop_pre_header
    _
  $region3: #{final_output.1} parent=0 // loop_header
    %s9 = sphi 0, %s13
    %p10 = scmp.ge.s32.totalorder %s9, 4
    %s19 = sphi 0, %s21
    %s22 = sphi 0, %s19
    %s23 = sphi 0, %s22
    %s39 = sphi 0, %s23
    %s43 = sphi 0, %s43
    %s45 = sphi 0, %s43
    %s46 = sphi 0, %s45
    %s60 = sphi 0, %s46
    %s64 = sphi 0, %s64
    %s66 = sphi 0, %s64
    %s67 = sphi 0, %s66
    %s81 = sphi 0, %s67
    %s87 = sphi 0, %s89
    %s90 = sphi 0, %s87
    %s91 = sphi 0, %s90
    %s107 = sphi 0, %s91
  $region4: #{final_output.1} parent=0 // loop_header_branch
    %12 = sbr.rel (%p10) target = $region8
  $region5: #{final_output.1} parent=0 // loop_body
    %s14 = ssub.s32 %s9, 1
    %s15 = ssub.s32 %s9, 2
    %s16 = sadd.s32 %s9, 1
    %s17 = ssub.s32 %s9, %s16
    %p18 = scmp.eq.s32.totalorder %s17, 0
    %s20 = sadd.s32 %s19, 1
    %s21 = scalar_select %p18, %s19, %s20
    %p24 = pneg %p18
    %p25 = scmp.eq.s32.totalorder %s9, 1
    %p26 = por %p24, %p25
    %p27 = scmp.ne.s32.totalorder %s19, %s22
    %p28 = scmp.eq.s32.totalorder %s9, 0
    %p29 = por %p27, %p28
    %p30 = scmp.ne.s32.totalorder %s19, %s22
    %p31 = scmp.eq.s32.totalorder %s14, 1
    %p32 = por %p30, %p31
    %p33 = scmp.ne.s32.totalorder %s22, %s23
    %p34 = scmp.eq.s32.totalorder %s14, 0
    %p35 = por %p33, %p34
    %p36 = scmp.ne.s32.totalorder %s22, %s23
    %p37 = scmp.eq.s32.totalorder %s15, 1
    %p38 = por %p36, %p37
    %p40 = scmp.ne.s32.totalorder %s23, %s39
    %p41 = scmp.eq.s32.totalorder %s15, 0
    %p42 = por %p40, %p41
    %s44 = sadd.s32 %s43, 1
    %p47 = scmp.eq.s32.totalorder %s9, 1
    %p48 = scmp.ne.s32.totalorder %s43, %s45
    %p49 = scmp.eq.s32.totalorder %s9, 0
    %p50 = por %p48, %p49
    %p51 = scmp.ne.s32.totalorder %s43, %s45
    %p52 = scmp.eq.s32.totalorder %s14, 1
    %p53 = por %p51, %p52
    %p54 = scmp.ne.s32.totalorder %s45, %s46
    %p55 = scmp.eq.s32.totalorder %s14, 0
    %p56 = por %p54, %p55
    %p57 = scmp.ne.s32.totalorder %s45, %s46
    %p58 = scmp.eq.s32.totalorder %s15, 1
    %p59 = por %p57, %p58
    %p61 = scmp.ne.s32.totalorder %s46, %s60
    %p62 = scmp.eq.s32.totalorder %s15, 0
    %p63 = por %p61, %p62
    %s65 = sadd.s32 %s64, 1
    %p68 = scmp.eq.s32.totalorder %s9, 1
    %p69 = scmp.ne.s32.totalorder %s64, %s66
    %p70 = scmp.eq.s32.totalorder %s9, 0
    %p71 = por %p69, %p70
    %p72 = scmp.ne.s32.totalorder %s64, %s66
    %p73 = scmp.eq.s32.totalorder %s14, 1
    %p74 = por %p72, %p73
    %p75 = scmp.ne.s32.totalorder %s66, %s67
    %p76 = scmp.eq.s32.totalorder %s14, 0
    %p77 = por %p75, %p76
    %p78 = scmp.ne.s32.totalorder %s66, %s67
    %p79 = scmp.eq.s32.totalorder %s15, 1
    %p80 = por %p78, %p79
    %p82 = scmp.ne.s32.totalorder %s67, %s81
    %p83 = scmp.eq.s32.totalorder %s15, 0
    %p84 = por %p82, %p83
    %s85 = ssub.s32 %s9, %s16
    %p86 = scmp.eq.s32.totalorder %s85, 0
    %s88 = sadd.s32 %s87, 1
    %s89 = scalar_select %p86, %s87, %s88
    %p92 = pneg %p86
    %p93 = scmp.eq.s32.totalorder %s9, 1
    %p94 = por %p92, %p93
    %p95 = scmp.ne.s32.totalorder %s87, %s90
    %p96 = scmp.eq.s32.totalorder %s9, 0
    %p97 = por %p95, %p96
    %p98 = scmp.ne.s32.totalorder %s87, %s90
    %p99 = scmp.eq.s32.totalorder %s14, 1
    %p100 = por %p98, %p99
    %p101 = scmp.ne.s32.totalorder %s90, %s91
    %p102 = scmp.eq.s32.totalorder %s14, 0
    %p103 = por %p101, %p102
    %p104 = scmp.ne.s32.totalorder %s90, %s91
    %p105 = scmp.eq.s32.totalorder %s15, 1
    %p106 = por %p104, %p105
    %p108 = scmp.ne.s32.totalorder %s91, %s107
    %p109 = scmp.eq.s32.totalorder %s15, 0
    %p110 = por %p108, %p109
    %p111 = scmp.le.s32.totalorder 1, %s9
    %p112 = scmp.lt.s32.totalorder %s9, 3
    %p113 = pnand %p111, %p112
    %p114 = pneg %p113
    // Predicated region
    $region9: #{final_output.1} parent=5 // pred_check
      _
    $region10: #{final_output.1} parent=5 // pred_check_branch
      %116 = sbr.rel (%p113) target = $region12
    $region11: #{final_output.1} parent=5 // pred_region
      %s117 = ssub.s32 %s9, 1
      // Predicated region
      $region13: #{final_output.1} parent=11 // pred_check
        %p118 = pneg %p56
      $region14: #{final_output.1} parent=11 // pred_check_branch
        %120 = sbr.rel (%p118) target = $region16
      $region15: #{final_output.1} parent=11 // pred_region
        _
      $region16: #{final_output.1} parent=11 // pred_fallthru
        _
      // Predicated region
      $region17: #{final_output.1} parent=11 // pred_check
        %p121 = pneg %p77
      $region18: #{final_output.1} parent=11 // pred_check_branch
        %123 = sbr.rel (%p121) target = $region20
      $region19: #{final_output.1} parent=11 // pred_region
        _
      $region20: #{final_output.1} parent=11 // pred_fallthru
        _
    $region12: #{final_output.1} parent=5 // pred_fallthru
      _
    %p124 = scmp.lt.s32.totalorder %s9, 2
    // Predicated region
    $region21: #{final_output.1} parent=5 // pred_check
      %p125 = pneg %p124
    $region22: #{final_output.1} parent=5 // pred_check_branch
      %127 = sbr.rel (%p125) target = $region24
    $region23: #{final_output.1} parent=5 // pred_region
      // Predicated region
      $region25: #{final_output.1} parent=23 // pred_check
        %p128 = pneg %p29
      $region26: #{final_output.1} parent=23 // pred_check_branch
        %130 = sbr.rel (%p128) target = $region28
      $region27: #{final_output.1} parent=23 // pred_region
        %s131 = smul.u32 2, %s9
        %p132 = scmp.lt.s32.totalorder %s131, 3
        %s133 = scalar_select %p132, %s131, 3
        %s134 = smul.addr %s133, 8
        %s135 = scalar_lea.vmem %s0, %s134
        %s136 = smul.u32 2, %s9
      $region28: #{final_output.1} parent=23 // pred_fallthru
        _
    $region24: #{final_output.1} parent=5 // pred_fallthru
      _
    %p137 = scmp.le.s32.totalorder 1, %s9
    %p138 = scmp.lt.s32.totalorder %s9, 3
    %p139 = pnand %p137, %p138
    %p140 = pneg %p139
    // Predicated region
    $region29: #{final_output.1} parent=5 // pred_check
      _
    $region30: #{final_output.1} parent=5 // pred_check_branch
      %142 = sbr.rel (%p139) target = $region32
    $region31: #{final_output.1} parent=5 // pred_region
      %s143 = ssub.s32 %s9, 1
      %s144 = smul.u32 2, %s14
      %p145 = scmp.lt.s32.totalorder %s144, 3
      %s146 = scalar_select %p145, %s144, 3
      %s147 = smul.addr %s146, 8
      %s148 = scalar_lea.vmem %s0, %s147
      %p149 = pneg %p35
      %p150 = pneg %p32
      %p151 = pneg %p56
      %p152 = pneg %p53
      %p153 = pneg %p77
      %p154 = pneg %p74
      %p155 = pneg %p103
      %p156 = pneg %p100
      %s157 = smul.u32 2, %s14
      %p158 = scmp.lt.s32.totalorder %s157, 3
      %s159 = scalar_select %p158, %s157, 3
      %s160 = smul.addr %s159, 8
      %s161 = scalar_lea.vmem %s3, %s160
      %s162 = smul.u32 2, %s14
      %p163 = scmp.lt.s32.totalorder %s162, 3
      %s164 = scalar_select %p163, %s162, 3
      %s165 = smul.addr %s164, 8
      %s166 = scalar_lea.vmem %s0, %s165
      %s167 = smul.u32 2, %s14
      %s168 = smul.u32 2, %s14
      %p169 = scmp.lt.s32.totalorder %s168, 3
      %s170 = scalar_select %p169, %s168, 3
      %s171 = smul.addr %s170, 8
      %s172 = scalar_lea.vmem %s3, %s171
      %s173 = smul.u32 2, %s14
      %v175 = vld [vmem:[%s166] sm:$0xff]
      %v176 = vld [vmem:[%s166 + $0x8] sm:$0xff]
      %v177 = vpack.c.bf16 %v176, %v175
      %v178 = vld [vmem:[%s1] sm:$0xf]
      %v179 = vld [vmem:[%s2] sm:$0x1]
      %v181 = vlaneseq
      %v182 = vshrl.u32 %v181, 7
      %v183 = vsub.s32 0, %v182
      %v184 = vrot.slane %v179, %v183
      %vm186 = vcmask 64512
      %v188 = vsel %vm186, %v177, 0
      %vm190 = vcmask 1043456
      %v192 = vsel %vm190, %v178, 0
      %194 = vmatprep.subr.bf16.mxu0 0
      %195 = vmatpush1.bf16.msra.mxu0 %v192
      %196 = vmatprep.subr.bf16.mxu0 0
      %197 = vmatpush1.bf16.msra.mxu0 0
      %198 = vmatprep.subr.bf16.mxu0 0
      %199 = vmatpush1.bf16.msra.mxu0 0
      %200 = vmatprep.subr.bf16.mxu0 0
      %201 = vmatpush1.bf16.msra.mxu0 0
      %202 = vmatprep.subr.bf16.mxu0 0
      %203 = vmatpush1.bf16.msra.mxu0 0
      %204 = vmatprep.subr.bf16.mxu0 0
      %205 = vmatpush1.bf16.msra.mxu0 0
      %206 = vmatprep.subr.bf16.mxu0 0
      %207 = vmatpush1.bf16.msra.mxu0 0
      %208 = vmatprep.subr.bf16.mxu0 0
      %209 = vmatpush1.bf16.msra.mxu0 0
      %210 = vmatprep.subr.bf16.mxu0 0
      %211 = vmatpush1.bf16.msra.mxu0 0
      %212 = vmatprep.subr.bf16.mxu0 0
      %213 = vmatpush1.bf16.msra.mxu0 0
      %214 = vmatprep.subr.bf16.mxu0 0
      %215 = vmatpush1.bf16.msra.mxu0 0
      %216 = vmatprep.subr.bf16.mxu0 0
      %217 = vmatpush1.bf16.msra.mxu0 0
      %218 = vmatprep.subr.bf16.mxu0 0
      %219 = vmatpush1.bf16.msra.mxu0 0
      %220 = vmatprep.subr.bf16.mxu0 0
      %221 = vmatpush1.bf16.msra.mxu0 0
      %222 = vmatprep.subr.bf16.mxu0 0
      %223 = vmatpush1.bf16.msra.mxu0 0
      %224 = vmatprep.subr.bf16.mxu0 0
      %225 = vmatpush1.bf16.msra.mxu0 0
      %226 = vmatprep.mubr.bf16.mxu0 0
      %227 = vmatmul.mubr.bf16.gmra.mrb[0].mxu0 %v188
      %v228 = vpop.f32.mrb[0].mxu0
      %v229 = vadd.f32 %v184, %v228
      %v230 = vpop.f32.mrb[0].mxu0
      %v231 = vpop.f32.mrb[0].mxu0
      %v232 = vadd.f32 %v184, %v231
      %v233 = vpop.f32.mrb[0].mxu0
      %234 = vdwg.mxu0
      %v235 = vmul.f32 %v229, 0.5
      %v236 = vmul.f32 %v232, 0.5
      %v237 = vtanh.pop %v235
      %v238 = vtanh.pop %v236
      %v239 = vmul.f32 %v237, 0.5
      %v240 = vmul.f32 %v238, 0.5
      %v241 = vadd.f32 %v239, 0.5
      %v242 = vadd.f32 %v240, 0.5
      %243 = vst [vmem:[%s172] sm:$0xff] %v241
      %244 = vst [vmem:[%s172 + $0x8] sm:$0xff] %v242
      %s245 = smul.u32 2, %s14
      %p246 = scmp.lt.s32.totalorder %s245, 3
      %s247 = scalar_select %p246, %s245, 3
      %s248 = smul.addr %s247, 8
      %s249 = scalar_lea.vmem %s3, %s248
      // Predicated region
      $region33: #{final_output.1} parent=31 // pred_check
        %p250 = pneg %p100
      $region34: #{final_output.1} parent=31 // pred_check_branch
        %252 = sbr.rel (%p250) target = $region36
      $region35: #{final_output.1} parent=31 // pred_region
        %s253 = smul.u32 2, %s14
      $region36: #{final_output.1} parent=31 // pred_fallthru
        _
    $region32: #{final_output.1} parent=5 // pred_fallthru
      _
    %p254 = scmp.le.s32.totalorder 2, %s9
    // Predicated region
    $region37: #{final_output.1} parent=5 // pred_check
      %p255 = pneg %p254
    $region38: #{final_output.1} parent=5 // pred_check_branch
      %257 = sbr.rel (%p255) target = $region40
    $region39: #{final_output.1} parent=5 // pred_region
      %s258 = ssub.s32 %s9, 2
      // Predicated region
      $region41: #{final_output.1} parent=39 // pred_check
        %p259 = pneg %p106
      $region42: #{final_output.1} parent=39 // pred_check_branch
        %261 = sbr.rel (%p259) target = $region44
      $region43: #{final_output.1} parent=39 // pred_region
        %s262 = smul.u32 2, %s15
        %p263 = scmp.lt.s32.totalorder %s262, 3
        %s264 = scalar_select %p263, %s262, 3
        %s265 = smul.addr %s264, 8
        %s266 = scalar_lea.vmem %s3, %s265
      $region44: #{final_output.1} parent=39 // pred_fallthru
        _
    $region40: #{final_output.1} parent=5 // pred_fallthru
      _
  $region6: #{final_output.1} parent=0 // loop_footer
    %s13 = sadd.s32 1, %s9
  $region7: #{final_output.1} parent=0 // loop_footer_branch
    %8 = sbr.rel target = $region3
  $region8: #{final_output.1} parent=0 // loop_exit
    _

</llo_original>
